<compile_context>
chip_gen: v5e
topology: v5e:2x2
jax: 0.10.0
libtpu: 0.0.40
codegen_flags: <defaults>
</compile_context>

<pallas_src>
import jax
import jax.numpy as jnp
from jax import lax
from jax.experimental import pallas as pl
from jax.experimental.pallas import tpu as pltpu

DICT_LEN = 128    # dict_len   (vocab, lane-aligned)
EMB_LEN = 32      # embedding_len
HIDDEN = 32       # hidden_num
BATCH = 2
SENT_LEN = 8


def _poem_kernel(pre_ref, tgt_ref, emb_ref, wih_ref, whh_ref, b_ref,
                 wcls_ref, bcls_ref, loss_ref, pred_ref, h_all_ref):
    B, S, H, V = BATCH, SENT_LEN, HIDDEN, DICT_LEN
    SB = S * B

    # ---- Embedding gather fused in-kernel as one-hot @ table (single MXU op)
    tok = pre_ref[...]                                         # (SB, 1) int32, time-major
    iota_v = lax.broadcasted_iota(jnp.int32, (SB, V), 1)       # (SB, V) — reused 3x below
    sel = (iota_v == tok).astype(jnp.float32)                  # one-hot rows
    x_all = jnp.dot(sel, emb_ref[...],
                    preferred_element_type=jnp.float32)        # (SB, E)

    # ---- Input projection hoisted out of the recurrence (single MXU op) ----
    gates_x = jnp.dot(x_all, wih_ref[...],
                      preferred_element_type=jnp.float32) + b_ref[...]   # (SB, 4H)

    w_hh = whh_ref[...]                                        # (H, 4H), loaded once

    # ---- LSTM recurrence, fully unrolled (S static); body is just the cell --
    h = jnp.zeros((B, H), jnp.float32)
    c = jnp.zeros((B, H), jnp.float32)
    for t in range(S):
        g = gates_x[t * B:(t + 1) * B, :] + jnp.dot(
            h, w_hh, preferred_element_type=jnp.float32)       # (B, 4H)
        sg = jax.nn.sigmoid(g)                                 # full-width EUP push
        tg = jnp.tanh(g)                                       # full-width EUP push
        i_g = sg[:, 0 * H:1 * H]                               # PyTorch gate order i,f,g,o
        f_g = sg[:, 1 * H:2 * H]
        g_g = tg[:, 2 * H:3 * H]
        o_g = sg[:, 3 * H:4 * H]
        c = f_g * c + i_g * g_g
        h = o_g * jnp.tanh(c)
        h_all_ref[t * B:(t + 1) * B, :] = h                    # single small store/step

    # ---- Classifier + CE hoisted out of the loop (single MXU op) ------------
    h_all = h_all_ref[...]                                     # (SB, H)
    logits = jnp.dot(h_all, wcls_ref[...],
                     preferred_element_type=jnp.float32) + bcls_ref[...]  # (SB, V)

    m = jnp.max(logits, axis=-1, keepdims=True)
    lse = m + jnp.log(jnp.sum(jnp.exp(logits - m), axis=-1, keepdims=True))
    tgt = tgt_ref[...]                                         # (SB, 1) int32
    correct = jnp.sum(jnp.where(iota_v == tgt, logits, 0.0),
                      axis=-1, keepdims=True)                  # (SB, 1)
    # CrossEntropyLoss(reduction='mean') over the B*S token positions.
    loss_ref[0, 0] = jnp.sum(lse - correct) * (1.0 / SB)

    # ---- Inference path: torch.argmax(pre, -1).reshape(-1)[-1] --------------
    # In time-major layout (batch B-1, timestep S-1) is the last row; reuse the
    # logits already computed above.
    last = logits[SB - 1:SB, :]                                # (1, V)
    last_max = jnp.max(last, axis=-1, keepdims=True)
    iota_row = lax.broadcasted_iota(jnp.int32, (1, V), 1)
    pred_ref[0, 0] = jnp.min(jnp.where(last == last_max, iota_row, V))


@jax.jit
def poem_generation_forward(pre_idx, later_idx, params):
    """Returns (mean CE loss, last-token argmax prediction)."""
    B, S = pre_idx.shape
    # Only integer-index plumbing + weight transposes remain outside the
    # kernel (tiny int32 / layout ops).
    pre_col = pre_idx.T.reshape(S * B, 1).astype(jnp.int32)    # time-major tokens
    tgt_col = later_idx.T.reshape(S * B, 1).astype(jnp.int32)  # time-major targets

    w_ih = params["w_ih"].T                                    # (E, 4H)
    w_hh = params["w_hh"].T                                    # (H, 4H)
    b = (params["b_ih"] + params["b_hh"]).reshape(1, -1)       # (1, 4H)
    w_cls = params["w_cls"].T                                  # (H, V)
    b_cls = params["b_cls"].reshape(1, -1)                     # (1, V)

    vmem = pl.BlockSpec(memory_space=pltpu.MemorySpace.VMEM)
    smem = pl.BlockSpec(memory_space=pltpu.MemorySpace.SMEM)
    loss, pred = pl.pallas_call(
        _poem_kernel,
        out_shape=(jax.ShapeDtypeStruct((1, 1), jnp.float32),
                   jax.ShapeDtypeStruct((1, 1), jnp.int32)),
        in_specs=[vmem] * 8,
        out_specs=(smem, smem),
        scratch_shapes=[pltpu.VMEM((S * B, HIDDEN), jnp.float32)],
    )(pre_col, tgt_col, params["embedding"], w_ih, w_hh, b, w_cls, b_cls)
    return loss[0, 0], pred[0, 0]


def init_params(key):
    ks = jax.random.split(key, 7)
    bound = 1.0 / (HIDDEN ** 0.5)
    u = lambda k, shape: jax.random.uniform(k, shape, jnp.float32, -bound, bound)
    return dict(
        embedding=jax.random.normal(ks[0], (DICT_LEN, EMB_LEN), jnp.float32),
        w_ih=u(ks[1], (4 * HIDDEN, EMB_LEN)),    # PyTorch lstm.weight_ih_l0
        w_hh=u(ks[2], (4 * HIDDEN, HIDDEN)),     # PyTorch lstm.weight_hh_l0
        b_ih=u(ks[3], (4 * HIDDEN,)),
        b_hh=u(ks[4], (4 * HIDDEN,)),
        w_cls=u(ks[5], (DICT_LEN, HIDDEN)),      # PyTorch cls.weight
        b_cls=u(ks[6], (DICT_LEN,)),
    )


def reference_forward(pre_idx, later_idx, params):
    """Pure-JAX reference mirroring the PyTorch semantics."""
    B, S = pre_idx.shape
    emb = params["embedding"][pre_idx]
    w_ih, w_hh = params["w_ih"], params["w_hh"]
    b = params["b_ih"] + params["b_hh"]
    h = jnp.zeros((B, HIDDEN), jnp.float32)
    c = jnp.zeros((B, HIDDEN), jnp.float32)
    outs = []
    for t in range(S):
        gates = emb[:, t, :] @ w_ih.T + h @ w_hh.T + b
        i = jax.nn.sigmoid(gates[:, :HIDDEN])
        f = jax.nn.sigmoid(gates[:, HIDDEN:2 * HIDDEN])
        g = jnp.tanh(gates[:, 2 * HIDDEN:3 * HIDDEN])
        o = jax.nn.sigmoid(gates[:, 3 * HIDDEN:])
        c = f * c + i * g
        h = o * jnp.tanh(c)
        outs.append(h)
    out = jnp.stack(outs, axis=1)                               # (B, S, H)
    logits = out @ params["w_cls"].T + params["b_cls"]          # (B, S, V)
    flat = logits.reshape(B * S, -1)
    tgt = later_idx.reshape(-1)
    lse = jax.nn.logsumexp(flat, axis=-1)
    loss = jnp.mean(lse - flat[jnp.arange(B * S), tgt])
    pred_last = jnp.argmax(logits, axis=-1).reshape(-1)[-1]
    return loss, pred_last


if __name__ == "__main__":
    key = jax.random.PRNGKey(0)
    pkey, dk1, dk2 = jax.random.split(key, 3)
    params = init_params(pkey)
    pre_idx = jax.random.randint(dk1, (BATCH, SENT_LEN), 0, DICT_LEN)
    later_idx = jax.random.randint(dk2, (BATCH, SENT_LEN), 0, DICT_LEN)

    loss, pred = poem_generation_forward(pre_idx, later_idx, params)
    jax.block_until_ready((loss, pred))

    ref_loss, ref_pred = reference_forward(pre_idx, later_idx, params)
    assert abs(float(loss) - float(ref_loss)) < 1e-3, (float(loss), float(ref_loss))
    assert int(pred) == int(ref_pred), (int(pred), int(ref_pred))
    print("KERNEL_OK")
</pallas_src>

<mosaic_0001>
module attributes {stable_mosaic.version = 11 : i64} {
  func.func @_poem_kernel(%arg0: memref<16x1xi32, #tpu.memory_space<vmem>>, %arg1: memref<16x1xi32, #tpu.memory_space<vmem>>, %arg2: memref<128x32xf32, #tpu.memory_space<vmem>>, %arg3: memref<32x128xf32, #tpu.memory_space<vmem>>, %arg4: memref<32x128xf32, #tpu.memory_space<vmem>>, %arg5: memref<1x128xf32, #tpu.memory_space<vmem>>, %arg6: memref<32x128xf32, #tpu.memory_space<vmem>>, %arg7: memref<1x128xf32, #tpu.memory_space<vmem>>, %arg8: memref<1x1xf32, #tpu.memory_space<smem>>, %arg9: memref<1x1xi32, #tpu.memory_space<smem>>, %arg10: memref<16x32xf32, #tpu.memory_space<vmem>>) attributes {dimension_semantics = [], scalar_prefetch = 0 : i64, scratch_operands = 1 : i64, tpu.core_type = #tpu.core_type<tc>} {
    %c0 = arith.constant 0 : index
    %c0_0 = arith.constant 0 : index
    %0 = vector.load %arg0[%c0, %c0_0] : memref<16x1xi32, #tpu.memory_space<vmem>>, vector<16x1xi32>
    %1 = tpu.iota {dimensions = array<i32: 1>} : vector<16x128xi32>
    %2 = vector.broadcast %0 : vector<16x1xi32> to vector<16x128xi32>
    %3 = arith.cmpi eq, %1, %2 : vector<16x128xi32>
    %4 = arith.extui %3 : vector<16x128xi1> to vector<16x128xi32>
    %5 = arith.sitofp %4 : vector<16x128xi32> to vector<16x128xf32>
    %c0_1 = arith.constant 0 : index
    %c0_2 = arith.constant 0 : index
    %6 = vector.load %arg2[%c0_1, %c0_2] : memref<128x32xf32, #tpu.memory_space<vmem>>, vector<128x32xf32>
    %cst = arith.constant dense<0.000000e+00> : vector<16x32xf32>
    %7 = tpu.matmul %5, %6, %cst {dimension_numbers = #tpu.dot_dimension_numbers<[1], [0], [0], [1], [0, 0, 1, 1], [], []>} : vector<16x128xf32>, vector<128x32xf32>, vector<16x32xf32> -> vector<16x32xf32>
    %c0_3 = arith.constant 0 : index
    %c0_4 = arith.constant 0 : index
    %8 = vector.load %arg3[%c0_3, %c0_4] : memref<32x128xf32, #tpu.memory_space<vmem>>, vector<32x128xf32>
    %cst_5 = arith.constant dense<0.000000e+00> : vector<16x128xf32>
    %9 = tpu.matmul %7, %8, %cst_5 {dimension_numbers = #tpu.dot_dimension_numbers<[1], [0], [0], [1], [0, 0, 1, 1], [], []>} : vector<16x32xf32>, vector<32x128xf32>, vector<16x128xf32> -> vector<16x128xf32>
    %c0_6 = arith.constant 0 : index
    %c0_7 = arith.constant 0 : index
    %10 = vector.load %arg5[%c0_6, %c0_7] : memref<1x128xf32, #tpu.memory_space<vmem>>, vector<1x128xf32>
    %11 = vector.broadcast %10 : vector<1x128xf32> to vector<16x128xf32>
    %12 = arith.addf %9, %11 : vector<16x128xf32>
    %c0_8 = arith.constant 0 : index
    %c0_9 = arith.constant 0 : index
    %13 = vector.load %arg4[%c0_8, %c0_9] : memref<32x128xf32, #tpu.memory_space<vmem>>, vector<32x128xf32>
    %cst_10 = arith.constant 0.000000e+00 : f32
    %14 = vector.broadcast %cst_10 : f32 to vector<2x32xf32>
    %cst_11 = arith.constant 0.000000e+00 : f32
    %15 = vector.broadcast %cst_11 : f32 to vector<2x32xf32>
    %16 = vector.extract_strided_slice %12 {offsets = [0, 0], sizes = [2, 128], strides = [1, 1]} : vector<16x128xf32> to vector<2x128xf32>
    %cst_12 = arith.constant dense<0.000000e+00> : vector<2x128xf32>
    %17 = tpu.matmul %14, %13, %cst_12 {dimension_numbers = #tpu.dot_dimension_numbers<[1], [0], [0], [1], [0, 0, 1, 1], [], []>} : vector<2x32xf32>, vector<32x128xf32>, vector<2x128xf32> -> vector<2x128xf32>
    %18 = arith.addf %16, %17 : vector<2x128xf32>
    %19 = arith.negf %18 : vector<2x128xf32>
    %20 = math.exp %19 : vector<2x128xf32>
    %cst_13 = arith.constant 1.000000e+00 : f32
    %21 = vector.broadcast %cst_13 : f32 to vector<2x128xf32>
    %22 = arith.addf %21, %20 : vector<2x128xf32>
    %23 = arith.divf %21, %22 : vector<2x128xf32>
    %24 = math.tanh %18 : vector<2x128xf32>
    %25 = vector.extract_strided_slice %23 {offsets = [0, 0], sizes = [2, 32], strides = [1, 1]} : vector<2x128xf32> to vector<2x32xf32>
    %26 = vector.extract_strided_slice %23 {offsets = [0, 32], sizes = [2, 32], strides = [1, 1]} : vector<2x128xf32> to vector<2x32xf32>
    %27 = vector.extract_strided_slice %24 {offsets = [0, 64], sizes = [2, 32], strides = [1, 1]} : vector<2x128xf32> to vector<2x32xf32>
    %28 = vector.extract_strided_slice %23 {offsets = [0, 96], sizes = [2, 32], strides = [1, 1]} : vector<2x128xf32> to vector<2x32xf32>
    %29 = arith.mulf %26, %15 : vector<2x32xf32>
    %30 = arith.mulf %25, %27 : vector<2x32xf32>
    %31 = arith.addf %29, %30 : vector<2x32xf32>
    %32 = math.tanh %31 : vector<2x32xf32>
    %33 = arith.mulf %28, %32 : vector<2x32xf32>
    %c0_14 = arith.constant 0 : index
    %c0_15 = arith.constant 0 : index
    %34 = vector.load %arg10[%c0_14, %c0_15] : memref<16x32xf32, #tpu.memory_space<vmem>>, vector<2x32xf32>
    tpu.vector_store %arg10[%c0_14, %c0_15], %33 {strides = array<i32>} : memref<16x32xf32, #tpu.memory_space<vmem>>, vector<2x32xf32>,
    %35 = vector.extract_strided_slice %12 {offsets = [2, 0], sizes = [2, 128], strides = [1, 1]} : vector<16x128xf32> to vector<2x128xf32>
    %cst_16 = arith.constant dense<0.000000e+00> : vector<2x128xf32>
    %36 = tpu.matmul %33, %13, %cst_16 {dimension_numbers = #tpu.dot_dimension_numbers<[1], [0], [0], [1], [0, 0, 1, 1], [], []>} : vector<2x32xf32>, vector<32x128xf32>, vector<2x128xf32> -> vector<2x128xf32>
    %37 = arith.addf %35, %36 : vector<2x128xf32>
    %38 = arith.negf %37 : vector<2x128xf32>
    %39 = math.exp %38 : vector<2x128xf32>
    %cst_17 = arith.constant 1.000000e+00 : f32
    %40 = vector.broadcast %cst_17 : f32 to vector<2x128xf32>
    %41 = arith.addf %40, %39 : vector<2x128xf32>
    %42 = arith.divf %40, %41 : vector<2x128xf32>
    %43 = math.tanh %37 : vector<2x128xf32>
    %44 = vector.extract_strided_slice %42 {offsets = [0, 0], sizes = [2, 32], strides = [1, 1]} : vector<2x128xf32> to vector<2x32xf32>
    %45 = vector.extract_strided_slice %42 {offsets = [0, 32], sizes = [2, 32], strides = [1, 1]} : vector<2x128xf32> to vector<2x32xf32>
    %46 = vector.extract_strided_slice %43 {offsets = [0, 64], sizes = [2, 32], strides = [1, 1]} : vector<2x128xf32> to vector<2x32xf32>
    %47 = vector.extract_strided_slice %42 {offsets = [0, 96], sizes = [2, 32], strides = [1, 1]} : vector<2x128xf32> to vector<2x32xf32>
    %48 = arith.mulf %45, %31 : vector<2x32xf32>
    %49 = arith.mulf %44, %46 : vector<2x32xf32>
    %50 = arith.addf %48, %49 : vector<2x32xf32>
    %51 = math.tanh %50 : vector<2x32xf32>
    %52 = arith.mulf %47, %51 : vector<2x32xf32>
    %c2 = arith.constant 2 : index
    %c0_18 = arith.constant 0 : index
    %53 = vector.load %arg10[%c2, %c0_18] : memref<16x32xf32, #tpu.memory_space<vmem>>, vector<2x32xf32>
    tpu.vector_store %arg10[%c2, %c0_18], %52 {strides = array<i32>} : memref<16x32xf32, #tpu.memory_space<vmem>>, vector<2x32xf32>,
    %54 = vector.extract_strided_slice %12 {offsets = [4, 0], sizes = [2, 128], strides = [1, 1]} : vector<16x128xf32> to vector<2x128xf32>
    %cst_19 = arith.constant dense<0.000000e+00> : vector<2x128xf32>
    %55 = tpu.matmul %52, %13, %cst_19 {dimension_numbers = #tpu.dot_dimension_numbers<[1], [0], [0], [1], [0, 0, 1, 1], [], []>} : vector<2x32xf32>, vector<32x128xf32>, vector<2x128xf32> -> vector<2x128xf32>
    %56 = arith.addf %54, %55 : vector<2x128xf32>
    %57 = arith.negf %56 : vector<2x128xf32>
    %58 = math.exp %57 : vector<2x128xf32>
    %cst_20 = arith.constant 1.000000e+00 : f32
    %59 = vector.broadcast %cst_20 : f32 to vector<2x128xf32>
    %60 = arith.addf %59, %58 : vector<2x128xf32>
    %61 = arith.divf %59, %60 : vector<2x128xf32>
    %62 = math.tanh %56 : vector<2x128xf32>
    %63 = vector.extract_strided_slice %61 {offsets = [0, 0], sizes = [2, 32], strides = [1, 1]} : vector<2x128xf32> to vector<2x32xf32>
    %64 = vector.extract_strided_slice %61 {offsets = [0, 32], sizes = [2, 32], strides = [1, 1]} : vector<2x128xf32> to vector<2x32xf32>
    %65 = vector.extract_strided_slice %62 {offsets = [0, 64], sizes = [2, 32], strides = [1, 1]} : vector<2x128xf32> to vector<2x32xf32>
    %66 = vector.extract_strided_slice %61 {offsets = [0, 96], sizes = [2, 32], strides = [1, 1]} : vector<2x128xf32> to vector<2x32xf32>
    %67 = arith.mulf %64, %50 : vector<2x32xf32>
    %68 = arith.mulf %63, %65 : vector<2x32xf32>
    %69 = arith.addf %67, %68 : vector<2x32xf32>
    %70 = math.tanh %69 : vector<2x32xf32>
    %71 = arith.mulf %66, %70 : vector<2x32xf32>
    %c4 = arith.constant 4 : index
    %c0_21 = arith.constant 0 : index
    %72 = vector.load %arg10[%c4, %c0_21] : memref<16x32xf32, #tpu.memory_space<vmem>>, vector<2x32xf32>
    tpu.vector_store %arg10[%c4, %c0_21], %71 {strides = array<i32>} : memref<16x32xf32, #tpu.memory_space<vmem>>, vector<2x32xf32>,
    %73 = vector.extract_strided_slice %12 {offsets = [6, 0], sizes = [2, 128], strides = [1, 1]} : vector<16x128xf32> to vector<2x128xf32>
    %cst_22 = arith.constant dense<0.000000e+00> : vector<2x128xf32>
    %74 = tpu.matmul %71, %13, %cst_22 {dimension_numbers = #tpu.dot_dimension_numbers<[1], [0], [0], [1], [0, 0, 1, 1], [], []>} : vector<2x32xf32>, vector<32x128xf32>, vector<2x128xf32> -> vector<2x128xf32>
    %75 = arith.addf %73, %74 : vector<2x128xf32>
    %76 = arith.negf %75 : vector<2x128xf32>
    %77 = math.exp %76 : vector<2x128xf32>
    %cst_23 = arith.constant 1.000000e+00 : f32
    %78 = vector.broadcast %cst_23 : f32 to vector<2x128xf32>
    %79 = arith.addf %78, %77 : vector<2x128xf32>
    %80 = arith.divf %78, %79 : vector<2x128xf32>
    %81 = math.tanh %75 : vector<2x128xf32>
    %82 = vector.extract_strided_slice %80 {offsets = [0, 0], sizes = [2, 32], strides = [1, 1]} : vector<2x128xf32> to vector<2x32xf32>
    %83 = vector.extract_strided_slice %80 {offsets = [0, 32], sizes = [2, 32], strides = [1, 1]} : vector<2x128xf32> to vector<2x32xf32>
    %84 = vector.extract_strided_slice %81 {offsets = [0, 64], sizes = [2, 32], strides = [1, 1]} : vector<2x128xf32> to vector<2x32xf32>
    %85 = vector.extract_strided_slice %80 {offsets = [0, 96], sizes = [2, 32], strides = [1, 1]} : vector<2x128xf32> to vector<2x32xf32>
    %86 = arith.mulf %83, %69 : vector<2x32xf32>
    %87 = arith.mulf %82, %84 : vector<2x32xf32>
    %88 = arith.addf %86, %87 : vector<2x32xf32>
    %89 = math.tanh %88 : vector<2x32xf32>
    %90 = arith.mulf %85, %89 : vector<2x32xf32>
    %c6 = arith.constant 6 : index
    %c0_24 = arith.constant 0 : index
    %91 = vector.load %arg10[%c6, %c0_24] : memref<16x32xf32, #tpu.memory_space<vmem>>, vector<2x32xf32>
    tpu.vector_store %arg10[%c6, %c0_24], %90 {strides = array<i32>} : memref<16x32xf32, #tpu.memory_space<vmem>>, vector<2x32xf32>,
    %92 = vector.extract_strided_slice %12 {offsets = [8, 0], sizes = [2, 128], strides = [1, 1]} : vector<16x128xf32> to vector<2x128xf32>
    %cst_25 = arith.constant dense<0.000000e+00> : vector<2x128xf32>
    %93 = tpu.matmul %90, %13, %cst_25 {dimension_numbers = #tpu.dot_dimension_numbers<[1], [0], [0], [1], [0, 0, 1, 1], [], []>} : vector<2x32xf32>, vector<32x128xf32>, vector<2x128xf32> -> vector<2x128xf32>
    %94 = arith.addf %92, %93 : vector<2x128xf32>
    %95 = arith.negf %94 : vector<2x128xf32>
    %96 = math.exp %95 : vector<2x128xf32>
    %cst_26 = arith.constant 1.000000e+00 : f32
    %97 = vector.broadcast %cst_26 : f32 to vector<2x128xf32>
    %98 = arith.addf %97, %96 : vector<2x128xf32>
    %99 = arith.divf %97, %98 : vector<2x128xf32>
    %100 = math.tanh %94 : vector<2x128xf32>
    %101 = vector.extract_strided_slice %99 {offsets = [0, 0], sizes = [2, 32], strides = [1, 1]} : vector<2x128xf32> to vector<2x32xf32>
    %102 = vector.extract_strided_slice %99 {offsets = [0, 32], sizes = [2, 32], strides = [1, 1]} : vector<2x128xf32> to vector<2x32xf32>
    %103 = vector.extract_strided_slice %100 {offsets = [0, 64], sizes = [2, 32], strides = [1, 1]} : vector<2x128xf32> to vector<2x32xf32>
    %104 = vector.extract_strided_slice %99 {offsets = [0, 96], sizes = [2, 32], strides = [1, 1]} : vector<2x128xf32> to vector<2x32xf32>
    %105 = arith.mulf %102, %88 : vector<2x32xf32>
    %106 = arith.mulf %101, %103 : vector<2x32xf32>
    %107 = arith.addf %105, %106 : vector<2x32xf32>
    %108 = math.tanh %107 : vector<2x32xf32>
    %109 = arith.mulf %104, %108 : vector<2x32xf32>
    %c8 = arith.constant 8 : index
    %c0_27 = arith.constant 0 : index
    %110 = vector.load %arg10[%c8, %c0_27] : memref<16x32xf32, #tpu.memory_space<vmem>>, vector<2x32xf32>
    tpu.vector_store %arg10[%c8, %c0_27], %109 {strides = array<i32>} : memref<16x32xf32, #tpu.memory_space<vmem>>, vector<2x32xf32>,
    %111 = vector.extract_strided_slice %12 {offsets = [10, 0], sizes = [2, 128], strides = [1, 1]} : vector<16x128xf32> to vector<2x128xf32>
    %cst_28 = arith.constant dense<0.000000e+00> : vector<2x128xf32>
    %112 = tpu.matmul %109, %13, %cst_28 {dimension_numbers = #tpu.dot_dimension_numbers<[1], [0], [0], [1], [0, 0, 1, 1], [], []>} : vector<2x32xf32>, vector<32x128xf32>, vector<2x128xf32> -> vector<2x128xf32>
    %113 = arith.addf %111, %112 : vector<2x128xf32>
    %114 = arith.negf %113 : vector<2x128xf32>
    %115 = math.exp %114 : vector<2x128xf32>
    %cst_29 = arith.constant 1.000000e+00 : f32
    %116 = vector.broadcast %cst_29 : f32 to vector<2x128xf32>
    %117 = arith.addf %116, %115 : vector<2x128xf32>
    %118 = arith.divf %116, %117 : vector<2x128xf32>
    %119 = math.tanh %113 : vector<2x128xf32>
    %120 = vector.extract_strided_slice %118 {offsets = [0, 0], sizes = [2, 32], strides = [1, 1]} : vector<2x128xf32> to vector<2x32xf32>
    %121 = vector.extract_strided_slice %118 {offsets = [0, 32], sizes = [2, 32], strides = [1, 1]} : vector<2x128xf32> to vector<2x32xf32>
    %122 = vector.extract_strided_slice %119 {offsets = [0, 64], sizes = [2, 32], strides = [1, 1]} : vector<2x128xf32> to vector<2x32xf32>
    %123 = vector.extract_strided_slice %118 {offsets = [0, 96], sizes = [2, 32], strides = [1, 1]} : vector<2x128xf32> to vector<2x32xf32>
    %124 = arith.mulf %121, %107 : vector<2x32xf32>
    %125 = arith.mulf %120, %122 : vector<2x32xf32>
    %126 = arith.addf %124, %125 : vector<2x32xf32>
    %127 = math.tanh %126 : vector<2x32xf32>
    %128 = arith.mulf %123, %127 : vector<2x32xf32>
    %c10 = arith.constant 10 : index
    %c0_30 = arith.constant 0 : index
    %129 = vector.load %arg10[%c10, %c0_30] : memref<16x32xf32, #tpu.memory_space<vmem>>, vector<2x32xf32>
    tpu.vector_store %arg10[%c10, %c0_30], %128 {strides = array<i32>} : memref<16x32xf32, #tpu.memory_space<vmem>>, vector<2x32xf32>,
    %130 = vector.extract_strided_slice %12 {offsets = [12, 0], sizes = [2, 128], strides = [1, 1]} : vector<16x128xf32> to vector<2x128xf32>
    %cst_31 = arith.constant dense<0.000000e+00> : vector<2x128xf32>
    %131 = tpu.matmul %128, %13, %cst_31 {dimension_numbers = #tpu.dot_dimension_numbers<[1], [0], [0], [1], [0, 0, 1, 1], [], []>} : vector<2x32xf32>, vector<32x128xf32>, vector<2x128xf32> -> vector<2x128xf32>
    %132 = arith.addf %130, %131 : vector<2x128xf32>
    %133 = arith.negf %132 : vector<2x128xf32>
    %134 = math.exp %133 : vector<2x128xf32>
    %cst_32 = arith.constant 1.000000e+00 : f32
    %135 = vector.broadcast %cst_32 : f32 to vector<2x128xf32>
    %136 = arith.addf %135, %134 : vector<2x128xf32>
    %137 = arith.divf %135, %136 : vector<2x128xf32>
    %138 = math.tanh %132 : vector<2x128xf32>
    %139 = vector.extract_strided_slice %137 {offsets = [0, 0], sizes = [2, 32], strides = [1, 1]} : vector<2x128xf32> to vector<2x32xf32>
    %140 = vector.extract_strided_slice %137 {offsets = [0, 32], sizes = [2, 32], strides = [1, 1]} : vector<2x128xf32> to vector<2x32xf32>
    %141 = vector.extract_strided_slice %138 {offsets = [0, 64], sizes = [2, 32], strides = [1, 1]} : vector<2x128xf32> to vector<2x32xf32>
    %142 = vector.extract_strided_slice %137 {offsets = [0, 96], sizes = [2, 32], strides = [1, 1]} : vector<2x128xf32> to vector<2x32xf32>
    %143 = arith.mulf %140, %126 : vector<2x32xf32>
    %144 = arith.mulf %139, %141 : vector<2x32xf32>
    %145 = arith.addf %143, %144 : vector<2x32xf32>
    %146 = math.tanh %145 : vector<2x32xf32>
    %147 = arith.mulf %142, %146 : vector<2x32xf32>
    %c12 = arith.constant 12 : index
    %c0_33 = arith.constant 0 : index
    %148 = vector.load %arg10[%c12, %c0_33] : memref<16x32xf32, #tpu.memory_space<vmem>>, vector<2x32xf32>
    tpu.vector_store %arg10[%c12, %c0_33], %147 {strides = array<i32>} : memref<16x32xf32, #tpu.memory_space<vmem>>, vector<2x32xf32>,
    %149 = vector.extract_strided_slice %12 {offsets = [14, 0], sizes = [2, 128], strides = [1, 1]} : vector<16x128xf32> to vector<2x128xf32>
    %cst_34 = arith.constant dense<0.000000e+00> : vector<2x128xf32>
    %150 = tpu.matmul %147, %13, %cst_34 {dimension_numbers = #tpu.dot_dimension_numbers<[1], [0], [0], [1], [0, 0, 1, 1], [], []>} : vector<2x32xf32>, vector<32x128xf32>, vector<2x128xf32> -> vector<2x128xf32>
    %151 = arith.addf %149, %150 : vector<2x128xf32>
    %152 = arith.negf %151 : vector<2x128xf32>
    %153 = math.exp %152 : vector<2x128xf32>
    %cst_35 = arith.constant 1.000000e+00 : f32
    %154 = vector.broadcast %cst_35 : f32 to vector<2x128xf32>
    %155 = arith.addf %154, %153 : vector<2x128xf32>
    %156 = arith.divf %154, %155 : vector<2x128xf32>
    %157 = math.tanh %151 : vector<2x128xf32>
    %158 = vector.extract_strided_slice %156 {offsets = [0, 0], sizes = [2, 32], strides = [1, 1]} : vector<2x128xf32> to vector<2x32xf32>
    %159 = vector.extract_strided_slice %156 {offsets = [0, 32], sizes = [2, 32], strides = [1, 1]} : vector<2x128xf32> to vector<2x32xf32>
    %160 = vector.extract_strided_slice %157 {offsets = [0, 64], sizes = [2, 32], strides = [1, 1]} : vector<2x128xf32> to vector<2x32xf32>
    %161 = vector.extract_strided_slice %156 {offsets = [0, 96], sizes = [2, 32], strides = [1, 1]} : vector<2x128xf32> to vector<2x32xf32>
    %162 = arith.mulf %159, %145 : vector<2x32xf32>
    %163 = arith.mulf %158, %160 : vector<2x32xf32>
    %164 = arith.addf %162, %163 : vector<2x32xf32>
    %165 = math.tanh %164 : vector<2x32xf32>
    %166 = arith.mulf %161, %165 : vector<2x32xf32>
    %c14 = arith.constant 14 : index
    %c0_36 = arith.constant 0 : index
    %167 = vector.load %arg10[%c14, %c0_36] : memref<16x32xf32, #tpu.memory_space<vmem>>, vector<2x32xf32>
    tpu.vector_store %arg10[%c14, %c0_36], %166 {strides = array<i32>} : memref<16x32xf32, #tpu.memory_space<vmem>>, vector<2x32xf32>,
    %c0_37 = arith.constant 0 : index
    %c0_38 = arith.constant 0 : index
    %168 = vector.load %arg10[%c0_37, %c0_38] : memref<16x32xf32, #tpu.memory_space<vmem>>, vector<16x32xf32>
    %c0_39 = arith.constant 0 : index
    %c0_40 = arith.constant 0 : index
    %169 = vector.load %arg6[%c0_39, %c0_40] : memref<32x128xf32, #tpu.memory_space<vmem>>, vector<32x128xf32>
    %cst_41 = arith.constant dense<0.000000e+00> : vector<16x128xf32>
    %170 = tpu.matmul %168, %169, %cst_41 {dimension_numbers = #tpu.dot_dimension_numbers<[1], [0], [0], [1], [0, 0, 1, 1], [], []>} : vector<16x32xf32>, vector<32x128xf32>, vector<16x128xf32> -> vector<16x128xf32>
    %c0_42 = arith.constant 0 : index
    %c0_43 = arith.constant 0 : index
    %171 = vector.load %arg7[%c0_42, %c0_43] : memref<1x128xf32, #tpu.memory_space<vmem>>, vector<1x128xf32>
    %172 = vector.broadcast %171 : vector<1x128xf32> to vector<16x128xf32>
    %173 = arith.addf %170, %172 : vector<16x128xf32>
    %cst_44 = arith.constant dense<0xFF800000> : vector<16xf32>
    %174 = vector.multi_reduction <maximumf>, %173, %cst_44 [1] : vector<16x128xf32> to vector<16xf32>
    %175 = vector.shape_cast %174 : vector<16xf32> to vector<16x1xf32>
    %176 = vector.broadcast %175 : vector<16x1xf32> to vector<16x128xf32>
    %177 = arith.subf %173, %176 : vector<16x128xf32>
    %178 = math.exp %177 : vector<16x128xf32>
    %cst_45 = arith.constant dense<0.000000e+00> : vector<16xf32>
    %179 = vector.multi_reduction <add>, %178, %cst_45 [1] : vector<16x128xf32> to vector<16xf32>
    %180 = vector.shape_cast %179 : vector<16xf32> to vector<16x1xf32>
    %181 = math.log %180 : vector<16x1xf32>
    %182 = arith.addf %175, %181 : vector<16x1xf32>
    %c0_46 = arith.constant 0 : index
    %c0_47 = arith.constant 0 : index
    %183 = vector.load %arg1[%c0_46, %c0_47] : memref<16x1xi32, #tpu.memory_space<vmem>>, vector<16x1xi32>
    %184 = vector.broadcast %183 : vector<16x1xi32> to vector<16x128xi32>
    %185 = arith.cmpi eq, %1, %184 : vector<16x128xi32>
    %cst_48 = arith.constant 0.000000e+00 : f32
    %186 = vector.broadcast %cst_48 : f32 to vector<16x128xf32>
    %187 = arith.select %185, %173, %186 : vector<16x128xi1>, vector<16x128xf32>
    %cst_49 = arith.constant dense<0.000000e+00> : vector<16xf32>
    %188 = vector.multi_reduction <add>, %187, %cst_49 [1] : vector<16x128xf32> to vector<16xf32>
    %189 = vector.shape_cast %188 : vector<16xf32> to vector<16x1xf32>
    %190 = arith.subf %182, %189 : vector<16x1xf32>
    %191 = vector.shape_cast %190 : vector<16x1xf32> to vector<1x16x1xf32>
    %cst_50 = arith.constant dense<0.000000e+00> : vector<1xf32>
    %192 = vector.multi_reduction <add>, %191, %cst_50 [1, 2] : vector<1x16x1xf32> to vector<1xf32>
    %193 = vector.shape_cast %192 : vector<1xf32> to vector<1x1x1xf32>
    %194 = vector.extract %193[0, 0, 0] : f32 from vector<1x1x1xf32>
    %cst_51 = arith.constant 6.250000e-02 : f32
    %195 = arith.mulf %194, %cst_51 : f32
    %c0_52 = arith.constant 0 : index
    %c0_53 = arith.constant 0 : index
    %196 = memref.load %arg8[%c0_52, %c0_53] : memref<1x1xf32, #tpu.memory_space<smem>>
    memref.store %195, %arg8[%c0_52, %c0_53] : memref<1x1xf32, #tpu.memory_space<smem>>
    %197 = vector.extract_strided_slice %173 {offsets = [15, 0], sizes = [1, 128], strides = [1, 1]} : vector<16x128xf32> to vector<1x128xf32>
    %cst_54 = arith.constant dense<0xFF800000> : vector<1xf32>
    %198 = vector.multi_reduction <maximumf>, %197, %cst_54 [1] : vector<1x128xf32> to vector<1xf32>
    %199 = vector.shape_cast %198 : vector<1xf32> to vector<1x1xf32>
    %200 = tpu.iota {dimensions = array<i32: 1>} : vector<1x128xi32>
    %201 = vector.broadcast %199 : vector<1x1xf32> to vector<1x128xf32>
    %202 = arith.cmpf oeq, %197, %201 : vector<1x128xf32>
    %c128_i32 = arith.constant 128 : i32
    %203 = vector.broadcast %c128_i32 : i32 to vector<1x128xi32>
    %204 = arith.select %202, %200, %203 : vector<1x128xi1>, vector<1x128xi32>
    %205 = vector.shape_cast %204 : vector<1x128xi32> to vector<1x1x128xi32>
    %cst_55 = arith.constant dense<2147483647> : vector<1xi32>
    %206 = vector.multi_reduction <minsi>, %205, %cst_55 [1, 2] : vector<1x1x128xi32> to vector<1xi32>
    %207 = vector.shape_cast %206 : vector<1xi32> to vector<1x1x1xi32>
    %208 = vector.extract %207[0, 0, 0] : i32 from vector<1x1x1xi32>
    %c0_56 = arith.constant 0 : index
    %c0_57 = arith.constant 0 : index
    %209 = memref.load %arg9[%c0_56, %c0_57] : memref<1x1xi32, #tpu.memory_space<smem>>
    memref.store %208, %arg9[%c0_56, %c0_57] : memref<1x1xi32, #tpu.memory_space<smem>>
    return
  }
}

</mosaic_0001>

<llo_original>
// kernel: poem_generation_forward.1
$region0: #{poem_generation_forward.1}
  #allocation0 [shape = 'u32[]', space=smem, size = 0x4, offset = 0x4, fixed_abs, tag = 'smem constant byte address 0x4 - core index']
  #allocation1 [shape = 'u32[72,128]{1,0:T(1,128)}', space=vmem, size = 0x9000, scoped, tag = 'internal scratch']
  #allocation2 [shape = 'f32[16,32]{1,0:T(8,128)}', space=vmem, size = 0x2000, scoped, tag = 'scratch operand']
  %s0 = inlined_call_operand.vmem [shape: s32[16,1], index: 0, kind: input, shape index: {}]
  %s1 = inlined_call_operand.vmem [shape: s32[16,1], index: 1, kind: input, shape index: {}]
  %s2 = inlined_call_operand.vmem [shape: f32[128,32], index: 2, kind: input, shape index: {}]
  %s3 = inlined_call_operand.vmem [shape: f32[32,128], index: 3, kind: input, shape index: {}]
  %s4 = inlined_call_operand.vmem [shape: f32[32,128], index: 4, kind: input, shape index: {}]
  %s5 = inlined_call_operand.vmem [shape: f32[1,128], index: 5, kind: input, shape index: {}]
  %s6 = inlined_call_operand.vmem [shape: f32[32,128], index: 6, kind: input, shape index: {}]
  %s7 = inlined_call_operand.vmem [shape: f32[1,128], index: 7, kind: input, shape index: {}]
  %s8 = inlined_call_operand.hbm [shape: f32[1,1], index: 8, kind: output, shape index: {0}]
  %s9 = inlined_call_operand.hbm [shape: s32[1,1], index: 9, kind: output, shape index: {1}]
  %10 = xla_tuple %s8, %s9
  %s11 = sld [smem:[#allocation0]]
  $region50: #{poem_generation_forward.1} parent=0
    _
  %s13 = ssub.s32 1, %s11
  %s14 = scalar_select 0, %s13, %s11
  $region1: #{poem_generation_forward.1} parent=0
    #allocation3 [shape = 'u8[512]{0}', space=smem, size = 0x200, scoped, tag = 'output window, operand 0, single buffered']
    #allocation4 [shape = 's32[1]{0}', space=sflag, size = 0x4, scoped, tag = 'scoped memory for poem_generation_forward.1']
    #allocation5 [shape = 'u8[512]{0}', space=smem, size = 0x200, scoped, tag = 'output window, operand 1, single buffered']
    #allocation6 [shape = 's32[1]{0}', space=sflag, size = 0x4, scoped, tag = 'scoped memory for poem_generation_forward.1']
    %15 = vsyncpa [#allocation4], 0
    %16 = vsyncpa [#allocation6], 0
    // Predicated region
    $region2: #{poem_generation_forward.1} parent=1 // pred_check
      _
    $region3: #{poem_generation_forward.1} parent=1 // pred_check_branch
      %18 = sbr.rel (0) target = $region5
    $region4: #{poem_generation_forward.1} parent=1 // pred_region
      _
    $region5: #{poem_generation_forward.1} parent=1 // pred_fallthru
      _
    // Predicated region
    $region6: #{poem_generation_forward.1} parent=1 // pred_check
      _
    $region7: #{poem_generation_forward.1} parent=1 // pred_check_branch
      %20 = sbr.rel (0) target = $region9
    $region8: #{poem_generation_forward.1} parent=1 // pred_region
      _
    $region9: #{poem_generation_forward.1} parent=1 // pred_fallthru
      _
    // Predicated region
    $region10: #{poem_generation_forward.1} parent=1 // pred_check
      _
    $region11: #{poem_generation_forward.1} parent=1 // pred_check_branch
      %22 = sbr.rel (0) target = $region13
    $region12: #{poem_generation_forward.1} parent=1 // pred_region
      _
    $region13: #{poem_generation_forward.1} parent=1 // pred_fallthru
      _
    // Predicated region
    $region14: #{poem_generation_forward.1} parent=1 // pred_check
      _
    $region15: #{poem_generation_forward.1} parent=1 // pred_check_branch
      %24 = sbr.rel (0) target = $region17
    $region16: #{poem_generation_forward.1} parent=1 // pred_region
      _
    $region17: #{poem_generation_forward.1} parent=1 // pred_fallthru
      _
    // Predicated region
    $region18: #{poem_generation_forward.1} parent=1 // pred_check
      _
    $region19: #{poem_generation_forward.1} parent=1 // pred_check_branch
      %26 = sbr.rel (0) target = $region21
    $region20: #{poem_generation_forward.1} parent=1 // pred_region
      _
    $region21: #{poem_generation_forward.1} parent=1 // pred_fallthru
      _
    // Predicated region
    $region22: #{poem_generation_forward.1} parent=1 // pred_check
      _
    $region23: #{poem_generation_forward.1} parent=1 // pred_check_branch
      %28 = sbr.rel (0) target = $region25
    $region24: #{poem_generation_forward.1} parent=1 // pred_region
      _
    $region25: #{poem_generation_forward.1} parent=1 // pred_fallthru
      _
    // Predicated region
    $region26: #{poem_generation_forward.1} parent=1 // pred_check
      _
    $region27: #{poem_generation_forward.1} parent=1 // pred_check_branch
      %30 = sbr.rel (0) target = $region29
    $region28: #{poem_generation_forward.1} parent=1 // pred_region
      _
    $region29: #{poem_generation_forward.1} parent=1 // pred_fallthru
      _
    // Predicated region
    $region30: #{poem_generation_forward.1} parent=1 // pred_check
      _
    $region31: #{poem_generation_forward.1} parent=1 // pred_check_branch
      %32 = sbr.rel (0) target = $region33
    $region32: #{poem_generation_forward.1} parent=1 // pred_region
      _
    $region33: #{poem_generation_forward.1} parent=1 // pred_fallthru
      _
    %v33 = vld [vmem:[%s0] sm:$0xff]
    %v34 = vld [vmem:[%s0 + $0x8] sm:$0xff]
    %v35 = vlaneseq
    %v36 = vand.u32 %v35, 127
    %37 = vset.pattern.permute.xlu0 0
    %38 = vperm.xlu0 %37, %v33
    %v39 = vpop.permute.xlu0 %38
    %40 = vset.pattern.permute.xlu0 0
    %41 = vperm.xlu0 %40, %v34
    %v42 = vpop.permute.xlu0 %41
    %vm43 = vcmp.eq.s32.totalorder %v36, %v39
    %vm44 = vcmp.eq.s32.totalorder %v36, %v42
    %v45 = vsel %vm43, 1, 0
    %v46 = vsel %vm44, 1, 0
    %v47 = vcvt.s32.f32 %v45
    %v48 = vcvt.s32.f32 %v46
    %v49 = vld [vmem:[%s2] sm:$0xff]
    %v50 = vld [vmem:[%s2 + $0x8] sm:$0xff]
    %v51 = vld [vmem:[%s2 + $0x10] sm:$0xff]
    %v52 = vld [vmem:[%s2 + $0x18] sm:$0xff]
    %v53 = vld [vmem:[%s2 + $0x20] sm:$0xff]
    %v54 = vld [vmem:[%s2 + $0x28] sm:$0xff]
    %v55 = vld [vmem:[%s2 + $0x30] sm:$0xff]
    %v56 = vld [vmem:[%s2 + $0x38] sm:$0xff]
    %v57 = vld [vmem:[%s2 + $0x40] sm:$0xff]
    %v58 = vld [vmem:[%s2 + $0x48] sm:$0xff]
    %v59 = vld [vmem:[%s2 + $0x50] sm:$0xff]
    %v60 = vld [vmem:[%s2 + $0x58] sm:$0xff]
    %v61 = vld [vmem:[%s2 + $0x60] sm:$0xff]
    %v62 = vld [vmem:[%s2 + $0x68] sm:$0xff]
    %v63 = vld [vmem:[%s2 + $0x70] sm:$0xff]
    %v64 = vld [vmem:[%s2 + $0x78] sm:$0xff]
    %65 = vmatpush.msra.mxu0 %v64
    %66 = vmatpush.msra.mxu0 %v63
    %67 = vmatpush.msra.mxu0 %v62
    %68 = vmatpush.msra.mxu0 %v61
    %69 = vmatpush.msra.mxu0 %v60
    %70 = vmatpush.msra.mxu0 %v59
    %71 = vmatpush.msra.mxu0 %v58
    %72 = vmatpush.msra.mxu0 %v57
    %73 = vmatpush.msra.mxu0 %v56
    %74 = vmatpush.msra.mxu0 %v55
    %75 = vmatpush.msra.mxu0 %v54
    %76 = vmatpush.msra.mxu0 %v53
    %77 = vmatpush.msra.mxu0 %v52
    %78 = vmatpush.msra.mxu0 %v51
    %79 = vmatpush.msra.mxu0 %v50
    %80 = vmatpush.msra.mxu0 %v49
    %81 = vmatmul.f32.gmra.mxu0 %v47
    %v82 = vpop.f32.mrf.mxu0
    %v83 = vadd.f32 0.0, %v82
    %84 = vmatmul.f32.gmra.mxu0 %v48
    %v85 = vpop.f32.mrf.mxu0
    %v86 = vadd.f32 0.0, %v85
    %87 = vdwg.mxu0
    %v88 = vld [vmem:[%s3] sm:$0xff]
    %v89 = vld [vmem:[%s3 + $0x8] sm:$0xff]
    %v90 = vld [vmem:[%s3 + $0x10] sm:$0xff]
    %v91 = vld [vmem:[%s3 + $0x18] sm:$0xff]
    %v92 = vld [vmem:[%s5] sm:$0x1]
    %v94 = vperm.slane %v92, 0
    %vm96 = vcmask 261120
    %v98 = vsel %vm96, %v83, 0
    %v101 = vsel %vm96, %v86, 0
    %103 = vmatpush.msra.mxu0 0.0
    %104 = vmatpush.msra.mxu0 0.0
    %105 = vmatpush.msra.mxu0 0.0
    %106 = vmatpush.msra.mxu0 0.0
    %107 = vmatpush.msra.mxu0 0.0
    %108 = vmatpush.msra.mxu0 0.0
    %109 = vmatpush.msra.mxu0 0.0
    %110 = vmatpush.msra.mxu0 0.0
    %111 = vmatpush.msra.mxu0 0.0
    %112 = vmatpush.msra.mxu0 0.0
    %113 = vmatpush.msra.mxu0 0.0
    %114 = vmatpush.msra.mxu0 0.0
    %115 = vmatpush.msra.mxu0 %v91
    %116 = vmatpush.msra.mxu0 %v90
    %117 = vmatpush.msra.mxu0 %v89
    %118 = vmatpush.msra.mxu0 %v88
    %119 = vmatmul.f32.gmra.mxu0 %v98
    %v120 = vpop.f32.mrf.mxu0
    %v121 = vadd.f32 %v94, %v120
    %122 = vmatmul.f32.gmra.mxu0 %v101
    %v123 = vpop.f32.mrf.mxu0
    %v124 = vadd.f32 %v94, %v123
    %125 = vdwg.mxu0
    %v126 = vld [vmem:[%s4] sm:$0xff]
    %v127 = vld [vmem:[%s4 + $0x8] sm:$0xff]
    %v128 = vld [vmem:[%s4 + $0x10] sm:$0xff]
    %v129 = vld [vmem:[%s4 + $0x18] sm:$0xff]
    %v131 = vsel %vm96, 0.0, 0
    %133 = vmatpush.msra.mxu0 0.0
    %134 = vmatpush.msra.mxu0 0.0
    %135 = vmatpush.msra.mxu0 0.0
    %136 = vmatpush.msra.mxu0 0.0
    %137 = vmatpush.msra.mxu0 0.0
    %138 = vmatpush.msra.mxu0 0.0
    %139 = vmatpush.msra.mxu0 0.0
    %140 = vmatpush.msra.mxu0 0.0
    %141 = vmatpush.msra.mxu0 0.0
    %142 = vmatpush.msra.mxu0 0.0
    %143 = vmatpush.msra.mxu0 0.0
    %144 = vmatpush.msra.mxu0 0.0
    %145 = vmatpush.msra.mxu0 %v129
    %146 = vmatpush.msra.mxu0 %v128
    %147 = vmatpush.msra.mxu0 %v127
    %148 = vmatpush.msra.mxu0 %v126
    %149 = vmatmul.f32.gmra.mxu0 %v131
    %v150 = vpop.f32.mrf.mxu0
    %v151 = vadd.f32 0.0, %v150
    %152 = vdwg.mxu0
    %v153 = vadd.f32 %v121, %v151
    %v154 = vxor.u32 %v153, 2147483648
    %v155 = vmul.f32 %v154, 1.442695
    %v156 = vpow.pop %v155
    %v157 = vadd.f32 %v156, 1.0
    %v158 = vrcp.pop %v157
    %v159 = vmul.f32 %v157, %v158
    %v160 = vsub.f32 1.0, %v159
    %v161 = vmul.f32 %v158, %v160
    %v162 = vadd.f32 %v158, %v161
    %vm163 = vweird.f32 %v157
    %vm164 = vweird.f32 %v158
    %vm165 = vmor %vm163, %vm164
    %v166 = vsel %vm165, %v158, %v162
    %v167 = vand.u32 2147483647, %v157
    %vm168 = vcmp.eq.f32.partialorder %v167, 8.507059e+37
    %v169 = vand.u32 %v157, 2147483648
    %v170 = vor.u32 1.1754944e-38, %v169
    %v171 = vsel %vm168, %v170, %v166
    %v172 = vmul.f32 1.0, %v171
    %v173 = vtanh.pop %v153
    %v174 = vmul.f32 %v172, 0.0
    %176 = vrot.lane.b32.xlu0 %v173, 64
    %v177 = vpop.permute.xlu0 %176
    %v179 = vmul.f32 %v172, %v177
    %181 = vrot.lane.b32.xlu0 %v179, 32
    %v182 = vpop.permute.xlu0 %181
    %v184 = vadd.f32 %v174, %v182
    %v185 = vtanh.pop %v184
    %187 = vrot.lane.b32.xlu0 %v185, 64
    %v188 = vpop.permute.xlu0 %187
    %v190 = vmul.f32 %v172, %v188
    %192 = vrot.lane.b32.xlu0 %v190, 32
    %v193 = vpop.permute.xlu0 %192
    %vm195 = vcmask 254976
    %196 = vst.msk [vmem:[#allocation2] sm:$0x3] %vm195, %v193
    %v197 = vsel %vm96, %v193, 0
    %199 = vmatpush.msra.mxu0 0.0
    %200 = vmatpush.msra.mxu0 0.0
    %201 = vmatpush.msra.mxu0 0.0
    %202 = vmatpush.msra.mxu0 0.0
    %203 = vmatpush.msra.mxu0 0.0
    %204 = vmatpush.msra.mxu0 0.0
    %205 = vmatpush.msra.mxu0 0.0
    %206 = vmatpush.msra.mxu0 0.0
    %207 = vmatpush.msra.mxu0 0.0
    %208 = vmatpush.msra.mxu0 0.0
    %209 = vmatpush.msra.mxu0 0.0
    %210 = vmatpush.msra.mxu0 0.0
    %211 = vmatpush.msra.mxu0 %v129
    %212 = vmatpush.msra.mxu0 %v128
    %213 = vmatpush.msra.mxu0 %v127
    %214 = vmatpush.msra.mxu0 %v126
    %215 = vmatmul.f32.gmra.mxu0 %v197
    %v216 = vpop.f32.mrf.mxu0
    %v217 = vadd.f32 0.0, %v216
    %218 = vdwg.mxu0
    %v220 = vrot.slane %v217, 6
    %v222 = vadd.f32 %v121, %v220
    %v223 = vxor.u32 %v222, 2147483648
    %v224 = vmul.f32 %v223, 1.442695
    %v225 = vpow.pop %v224
    %v226 = vadd.f32 %v225, 1.0
    %v227 = vrcp.pop %v226
    %v228 = vmul.f32 %v226, %v227
    %v229 = vsub.f32 1.0, %v228
    %v230 = vmul.f32 %v227, %v229
    %v231 = vadd.f32 %v227, %v230
    %vm232 = vweird.f32 %v226
    %vm233 = vweird.f32 %v227
    %vm234 = vmor %vm232, %vm233
    %v235 = vsel %vm234, %v227, %v231
    %v236 = vand.u32 2147483647, %v226
    %vm237 = vcmp.eq.f32.partialorder %v236, 8.507059e+37
    %v238 = vand.u32 %v226, 2147483648
    %v239 = vor.u32 1.1754944e-38, %v238
    %v240 = vsel %vm237, %v239, %v235
    %v241 = vmul.f32 1.0, %v240
    %v242 = vtanh.pop %v222
    %v244 = vrot.slane %v184, 6
    %v246 = vmul.f32 %v241, %v244
    %248 = vrot.lane.b32.xlu0 %v242, 64
    %v249 = vpop.permute.xlu0 %248
    %v251 = vmul.f32 %v241, %v249
    %253 = vrot.lane.b32.xlu0 %v251, 32
    %v254 = vpop.permute.xlu0 %253
    %v256 = vadd.f32 %v246, %v254
    %v257 = vtanh.pop %v256
    %259 = vrot.lane.b32.xlu0 %v257, 64
    %v260 = vpop.permute.xlu0 %259
    %v262 = vmul.f32 %v241, %v260
    %264 = vrot.lane.b32.xlu0 %v262, 32
    %v265 = vpop.permute.xlu0 %264
    %vm267 = vcmask 257026
    %268 = vst.msk [vmem:[#allocation2] sm:$0xc] %vm267, %v265
    %v269 = vrot.slane %v262, 2
    %270 = vrot.lane.b32.xlu0 %v269, 32
    %v271 = vpop.permute.xlu0 %270
    %v272 = vsel %vm96, %v271, 0
    %274 = vmatpush.msra.mxu0 0.0
    %275 = vmatpush.msra.mxu0 0.0
    %276 = vmatpush.msra.mxu0 0.0
    %277 = vmatpush.msra.mxu0 0.0
    %278 = vmatpush.msra.mxu0 0.0
    %279 = vmatpush.msra.mxu0 0.0
    %280 = vmatpush.msra.mxu0 0.0
    %281 = vmatpush.msra.mxu0 0.0
    %282 = vmatpush.msra.mxu0 0.0
    %283 = vmatpush.msra.mxu0 0.0
    %284 = vmatpush.msra.mxu0 0.0
    %285 = vmatpush.msra.mxu0 0.0
    %286 = vmatpush.msra.mxu0 %v129
    %287 = vmatpush.msra.mxu0 %v128
    %288 = vmatpush.msra.mxu0 %v127
    %289 = vmatpush.msra.mxu0 %v126
    %290 = vmatmul.f32.gmra.mxu0 %v272
    %v291 = vpop.f32.mrf.mxu0
    %v292 = vadd.f32 0.0, %v291
    %293 = vdwg.mxu0
    %v295 = vrot.slane %v292, 4
    %v297 = vadd.f32 %v121, %v295
    %v298 = vxor.u32 %v297, 2147483648
    %v299 = vmul.f32 %v298, 1.442695
    %v300 = vpow.pop %v299
    %v301 = vadd.f32 %v300, 1.0
    %v302 = vrcp.pop %v301
    %v303 = vmul.f32 %v301, %v302
    %v304 = vsub.f32 1.0, %v303
    %v305 = vmul.f32 %v302, %v304
    %v306 = vadd.f32 %v302, %v305
    %vm307 = vweird.f32 %v301
    %vm308 = vweird.f32 %v302
    %vm309 = vmor %vm307, %vm308
    %v310 = vsel %vm309, %v302, %v306
    %v311 = vand.u32 2147483647, %v301
    %vm312 = vcmp.eq.f32.partialorder %v311, 8.507059e+37
    %v313 = vand.u32 %v301, 2147483648
    %v314 = vor.u32 1.1754944e-38, %v313
    %v315 = vsel %vm312, %v314, %v310
    %v316 = vmul.f32 1.0, %v315
    %v317 = vtanh.pop %v297
    %v319 = vrot.slane %v256, 6
    %v321 = vmul.f32 %v316, %v319
    %323 = vrot.lane.b32.xlu0 %v317, 64
    %v324 = vpop.permute.xlu0 %323
    %v326 = vmul.f32 %v316, %v324
    %328 = vrot.lane.b32.xlu0 %v326, 32
    %v329 = vpop.permute.xlu0 %328
    %v331 = vadd.f32 %v321, %v329
    %v332 = vtanh.pop %v331
    %334 = vrot.lane.b32.xlu0 %v332, 64
    %v335 = vpop.permute.xlu0 %334
    %v337 = vmul.f32 %v316, %v335
    %339 = vrot.lane.b32.xlu0 %v337, 32
    %v340 = vpop.permute.xlu0 %339
    %vm342 = vcmask 259076
    %343 = vst.msk [vmem:[#allocation2] sm:$0x30] %vm342, %v340
    %v344 = vrot.slane %v337, 4
    %345 = vrot.lane.b32.xlu0 %v344, 32
    %v346 = vpop.permute.xlu0 %345
    %v347 = vsel %vm96, %v346, 0
    %349 = vmatpush.msra.mxu0 0.0
    %350 = vmatpush.msra.mxu0 0.0
    %351 = vmatpush.msra.mxu0 0.0
    %352 = vmatpush.msra.mxu0 0.0
    %353 = vmatpush.msra.mxu0 0.0
    %354 = vmatpush.msra.mxu0 0.0
    %355 = vmatpush.msra.mxu0 0.0
    %356 = vmatpush.msra.mxu0 0.0
    %357 = vmatpush.msra.mxu0 0.0
    %358 = vmatpush.msra.mxu0 0.0
    %359 = vmatpush.msra.mxu0 0.0
    %360 = vmatpush.msra.mxu0 0.0
    %361 = vmatpush.msra.mxu0 %v129
    %362 = vmatpush.msra.mxu0 %v128
    %363 = vmatpush.msra.mxu0 %v127
    %364 = vmatpush.msra.mxu0 %v126
    %365 = vmatmul.f32.gmra.mxu0 %v347
    %v366 = vpop.f32.mrf.mxu0
    %v367 = vadd.f32 0.0, %v366
    %368 = vdwg.mxu0
    %v370 = vrot.slane %v367, 2
    %v372 = vadd.f32 %v121, %v370
    %v373 = vxor.u32 %v372, 2147483648
    %v374 = vmul.f32 %v373, 1.442695
    %v375 = vpow.pop %v374
    %v376 = vadd.f32 %v375, 1.0
    %v377 = vrcp.pop %v376
    %v378 = vmul.f32 %v376, %v377
    %v379 = vsub.f32 1.0, %v378
    %v380 = vmul.f32 %v377, %v379
    %v381 = vadd.f32 %v377, %v380
    %vm382 = vweird.f32 %v376
    %vm383 = vweird.f32 %v377
    %vm384 = vmor %vm382, %vm383
    %v385 = vsel %vm384, %v377, %v381
    %v386 = vand.u32 2147483647, %v376
    %vm387 = vcmp.eq.f32.partialorder %v386, 8.507059e+37
    %v388 = vand.u32 %v376, 2147483648
    %v389 = vor.u32 1.1754944e-38, %v388
    %v390 = vsel %vm387, %v389, %v385
    %v391 = vmul.f32 1.0, %v390
    %v392 = vtanh.pop %v372
    %v394 = vrot.slane %v331, 6
    %v396 = vmul.f32 %v391, %v394
    %398 = vrot.lane.b32.xlu0 %v392, 64
    %v399 = vpop.permute.xlu0 %398
    %v401 = vmul.f32 %v391, %v399
    %403 = vrot.lane.b32.xlu0 %v401, 32
    %v404 = vpop.permute.xlu0 %403
    %v406 = vadd.f32 %v396, %v404
    %v407 = vtanh.pop %v406
    %409 = vrot.lane.b32.xlu0 %v407, 64
    %v410 = vpop.permute.xlu0 %409
    %v412 = vmul.f32 %v391, %v410
    %414 = vrot.lane.b32.xlu0 %v412, 32
    %v415 = vpop.permute.xlu0 %414
    %vm417 = vcmask 261126
    %418 = vst.msk [vmem:[#allocation2] sm:$0xc0] %vm417, %v415
    %v419 = vrot.slane %v412, 6
    %420 = vrot.lane.b32.xlu0 %v419, 32
    %v421 = vpop.permute.xlu0 %420
    %v422 = vsel %vm96, %v421, 0
    %424 = vmatpush.msra.mxu0 0.0
    %425 = vmatpush.msra.mxu0 0.0
    %426 = vmatpush.msra.mxu0 0.0
    %427 = vmatpush.msra.mxu0 0.0
    %428 = vmatpush.msra.mxu0 0.0
    %429 = vmatpush.msra.mxu0 0.0
    %430 = vmatpush.msra.mxu0 0.0
    %431 = vmatpush.msra.mxu0 0.0
    %432 = vmatpush.msra.mxu0 0.0
    %433 = vmatpush.msra.mxu0 0.0
    %434 = vmatpush.msra.mxu0 0.0
    %435 = vmatpush.msra.mxu0 0.0
    %436 = vmatpush.msra.mxu0 %v129
    %437 = vmatpush.msra.mxu0 %v128
    %438 = vmatpush.msra.mxu0 %v127
    %439 = vmatpush.msra.mxu0 %v126
    %440 = vmatmul.f32.gmra.mxu0 %v422
    %v441 = vpop.f32.mrf.mxu0
    %v442 = vadd.f32 0.0, %v441
    %443 = vdwg.mxu0
    %v444 = vadd.f32 %v124, %v442
    %v445 = vxor.u32 %v444, 2147483648
    %v446 = vmul.f32 %v445, 1.442695
    %v447 = vpow.pop %v446
    %v448 = vadd.f32 %v447, 1.0
    %v449 = vrcp.pop %v448
    %v450 = vmul.f32 %v448, %v449
    %v451 = vsub.f32 1.0, %v450
    %v452 = vmul.f32 %v449, %v451
    %v453 = vadd.f32 %v449, %v452
    %vm454 = vweird.f32 %v448
    %vm455 = vweird.f32 %v449
    %vm456 = vmor %vm454, %vm455
    %v457 = vsel %vm456, %v449, %v453
    %v458 = vand.u32 2147483647, %v448
    %vm459 = vcmp.eq.f32.partialorder %v458, 8.507059e+37
    %v460 = vand.u32 %v448, 2147483648
    %v461 = vor.u32 1.1754944e-38, %v460
    %v462 = vsel %vm459, %v461, %v457
    %v463 = vmul.f32 1.0, %v462
    %v464 = vtanh.pop %v444
    %v466 = vrot.slane %v406, 6
    %v468 = vmul.f32 %v463, %v466
    %470 = vrot.lane.b32.xlu0 %v464, 64
    %v471 = vpop.permute.xlu0 %470
    %v473 = vmul.f32 %v463, %v471
    %475 = vrot.lane.b32.xlu0 %v473, 32
    %v476 = vpop.permute.xlu0 %475
    %v478 = vadd.f32 %v468, %v476
    %v479 = vtanh.pop %v478
    %481 = vrot.lane.b32.xlu0 %v479, 64
    %v482 = vpop.permute.xlu0 %481
    %v484 = vmul.f32 %v463, %v482
    %486 = vrot.lane.b32.xlu0 %v484, 32
    %v487 = vpop.permute.xlu0 %486
    %489 = vst.msk [vmem:[#allocation2 + $0x8] sm:$0x3] %vm195, %v487
    %v490 = vsel %vm96, %v487, 0
    %492 = vmatpush.msra.mxu0 0.0
    %493 = vmatpush.msra.mxu0 0.0
    %494 = vmatpush.msra.mxu0 0.0
    %495 = vmatpush.msra.mxu0 0.0
    %496 = vmatpush.msra.mxu0 0.0
    %497 = vmatpush.msra.mxu0 0.0
    %498 = vmatpush.msra.mxu0 0.0
    %499 = vmatpush.msra.mxu0 0.0
    %500 = vmatpush.msra.mxu0 0.0
    %501 = vmatpush.msra.mxu0 0.0
    %502 = vmatpush.msra.mxu0 0.0
    %503 = vmatpush.msra.mxu0 0.0
    %504 = vmatpush.msra.mxu0 %v129
    %505 = vmatpush.msra.mxu0 %v128
    %506 = vmatpush.msra.mxu0 %v127
    %507 = vmatpush.msra.mxu0 %v126
    %508 = vmatmul.f32.gmra.mxu0 %v490
    %v509 = vpop.f32.mrf.mxu0
    %v510 = vadd.f32 0.0, %v509
    %511 = vdwg.mxu0
    %v513 = vrot.slane %v510, 6
    %v515 = vadd.f32 %v124, %v513
    %v516 = vxor.u32 %v515, 2147483648
    %v517 = vmul.f32 %v516, 1.442695
    %v518 = vpow.pop %v517
    %v519 = vadd.f32 %v518, 1.0
    %v520 = vrcp.pop %v519
    %v521 = vmul.f32 %v519, %v520
    %v522 = vsub.f32 1.0, %v521
    %v523 = vmul.f32 %v520, %v522
    %v524 = vadd.f32 %v520, %v523
    %vm525 = vweird.f32 %v519
    %vm526 = vweird.f32 %v520
    %vm527 = vmor %vm525, %vm526
    %v528 = vsel %vm527, %v520, %v524
    %v529 = vand.u32 2147483647, %v519
    %vm530 = vcmp.eq.f32.partialorder %v529, 8.507059e+37
    %v531 = vand.u32 %v519, 2147483648
    %v532 = vor.u32 1.1754944e-38, %v531
    %v533 = vsel %vm530, %v532, %v528
    %v534 = vmul.f32 1.0, %v533
    %v535 = vtanh.pop %v515
    %v537 = vrot.slane %v478, 6
    %v539 = vmul.f32 %v534, %v537
    %541 = vrot.lane.b32.xlu0 %v535, 64
    %v542 = vpop.permute.xlu0 %541
    %v544 = vmul.f32 %v534, %v542
    %546 = vrot.lane.b32.xlu0 %v544, 32
    %v547 = vpop.permute.xlu0 %546
    %v549 = vadd.f32 %v539, %v547
    %v550 = vtanh.pop %v549
    %552 = vrot.lane.b32.xlu0 %v550, 64
    %v553 = vpop.permute.xlu0 %552
    %v555 = vmul.f32 %v534, %v553
    %557 = vrot.lane.b32.xlu0 %v555, 32
    %v558 = vpop.permute.xlu0 %557
    %560 = vst.msk [vmem:[#allocation2 + $0x8] sm:$0xc] %vm267, %v558
    %v561 = vrot.slane %v555, 2
    %562 = vrot.lane.b32.xlu0 %v561, 32
    %v563 = vpop.permute.xlu0 %562
    %v564 = vsel %vm96, %v563, 0
    %566 = vmatpush.msra.mxu0 0.0
    %567 = vmatpush.msra.mxu0 0.0
    %568 = vmatpush.msra.mxu0 0.0
    %569 = vmatpush.msra.mxu0 0.0
    %570 = vmatpush.msra.mxu0 0.0
    %571 = vmatpush.msra.mxu0 0.0
    %572 = vmatpush.msra.mxu0 0.0
    %573 = vmatpush.msra.mxu0 0.0
    %574 = vmatpush.msra.mxu0 0.0
    %575 = vmatpush.msra.mxu0 0.0
    %576 = vmatpush.msra.mxu0 0.0
    %577 = vmatpush.msra.mxu0 0.0
    %578 = vmatpush.msra.mxu0 %v129
    %579 = vmatpush.msra.mxu0 %v128
    %580 = vmatpush.msra.mxu0 %v127
    %581 = vmatpush.msra.mxu0 %v126
    %582 = vmatmul.f32.gmra.mxu0 %v564
    %v583 = vpop.f32.mrf.mxu0
    %v584 = vadd.f32 0.0, %v583
    %585 = vdwg.mxu0
    %v587 = vrot.slane %v584, 4
    %v589 = vadd.f32 %v124, %v587
    %v590 = vxor.u32 %v589, 2147483648
    %v591 = vmul.f32 %v590, 1.442695
    %v592 = vpow.pop %v591
    %v593 = vadd.f32 %v592, 1.0
    %v594 = vrcp.pop %v593
    %v595 = vmul.f32 %v593, %v594
    %v596 = vsub.f32 1.0, %v595
    %v597 = vmul.f32 %v594, %v596
    %v598 = vadd.f32 %v594, %v597
    %vm599 = vweird.f32 %v593
    %vm600 = vweird.f32 %v594
    %vm601 = vmor %vm599, %vm600
    %v602 = vsel %vm601, %v594, %v598
    %v603 = vand.u32 2147483647, %v593
    %vm604 = vcmp.eq.f32.partialorder %v603, 8.507059e+37
    %v605 = vand.u32 %v593, 2147483648
    %v606 = vor.u32 1.1754944e-38, %v605
    %v607 = vsel %vm604, %v606, %v602
    %v608 = vmul.f32 1.0, %v607
    %v609 = vtanh.pop %v589
    %v611 = vrot.slane %v549, 6
    %v613 = vmul.f32 %v608, %v611
    %615 = vrot.lane.b32.xlu0 %v609, 64
    %v616 = vpop.permute.xlu0 %615
    %v618 = vmul.f32 %v608, %v616
    %620 = vrot.lane.b32.xlu0 %v618, 32
    %v621 = vpop.permute.xlu0 %620
    %v623 = vadd.f32 %v613, %v621
    %v624 = vtanh.pop %v623
    %626 = vrot.lane.b32.xlu0 %v624, 64
    %v627 = vpop.permute.xlu0 %626
    %v629 = vmul.f32 %v608, %v627
    %631 = vrot.lane.b32.xlu0 %v629, 32
    %v632 = vpop.permute.xlu0 %631
    %634 = vst.msk [vmem:[#allocation2 + $0x8] sm:$0x30] %vm342, %v632
    %v635 = vrot.slane %v629, 4
    %636 = vrot.lane.b32.xlu0 %v635, 32
    %v637 = vpop.permute.xlu0 %636
    %v638 = vsel %vm96, %v637, 0
    %640 = vmatpush.msra.mxu0 0.0
    %641 = vmatpush.msra.mxu0 0.0
    %642 = vmatpush.msra.mxu0 0.0
    %643 = vmatpush.msra.mxu0 0.0
    %644 = vmatpush.msra.mxu0 0.0
    %645 = vmatpush.msra.mxu0 0.0
    %646 = vmatpush.msra.mxu0 0.0
    %647 = vmatpush.msra.mxu0 0.0
    %648 = vmatpush.msra.mxu0 0.0
    %649 = vmatpush.msra.mxu0 0.0
    %650 = vmatpush.msra.mxu0 0.0
    %651 = vmatpush.msra.mxu0 0.0
    %652 = vmatpush.msra.mxu0 %v129
    %653 = vmatpush.msra.mxu0 %v128
    %654 = vmatpush.msra.mxu0 %v127
    %655 = vmatpush.msra.mxu0 %v126
    %656 = vmatmul.f32.gmra.mxu0 %v638
    %v657 = vpop.f32.mrf.mxu0
    %v658 = vadd.f32 0.0, %v657
    %659 = vdwg.mxu0
    %v661 = vrot.slane %v658, 2
    %v663 = vadd.f32 %v124, %v661
    %v664 = vxor.u32 %v663, 2147483648
    %v665 = vmul.f32 %v664, 1.442695
    %v666 = vpow.pop %v665
    %v667 = vadd.f32 %v666, 1.0
    %v668 = vrcp.pop %v667
    %v669 = vmul.f32 %v667, %v668
    %v670 = vsub.f32 1.0, %v669
    %v671 = vmul.f32 %v668, %v670
    %v672 = vadd.f32 %v668, %v671
    %vm673 = vweird.f32 %v667
    %vm674 = vweird.f32 %v668
    %vm675 = vmor %vm673, %vm674
    %v676 = vsel %vm675, %v668, %v672
    %v677 = vand.u32 2147483647, %v667
    %vm678 = vcmp.eq.f32.partialorder %v677, 8.507059e+37
    %v679 = vand.u32 %v667, 2147483648
    %v680 = vor.u32 1.1754944e-38, %v679
    %v681 = vsel %vm678, %v680, %v676
    %v682 = vmul.f32 1.0, %v681
    %v683 = vtanh.pop %v663
    %v685 = vrot.slane %v623, 6
    %v687 = vmul.f32 %v682, %v685
    %689 = vrot.lane.b32.xlu0 %v683, 64
    %v690 = vpop.permute.xlu0 %689
    %v692 = vmul.f32 %v682, %v690
    %694 = vrot.lane.b32.xlu0 %v692, 32
    %v695 = vpop.permute.xlu0 %694
    %v697 = vadd.f32 %v687, %v695
    %v698 = vtanh.pop %v697
    %700 = vrot.lane.b32.xlu0 %v698, 64
    %v701 = vpop.permute.xlu0 %700
    %v703 = vmul.f32 %v682, %v701
    %705 = vrot.lane.b32.xlu0 %v703, 32
    %v706 = vpop.permute.xlu0 %705
    %708 = vst.msk [vmem:[#allocation2 + $0x8] sm:$0xc0] %vm417, %v706
    %v709 = vld [vmem:[#allocation2] sm:$0xff]
    %v710 = vld [vmem:[#allocation2 + $0x8] sm:$0xff]
    %v711 = vld [vmem:[%s6] sm:$0xff]
    %v712 = vld [vmem:[%s6 + $0x8] sm:$0xff]
    %v713 = vld [vmem:[%s6 + $0x10] sm:$0xff]
    %v714 = vld [vmem:[%s6 + $0x18] sm:$0xff]
    %v715 = vld [vmem:[%s7] sm:$0x1]
    %v717 = vperm.slane %v715, 0
    %v720 = vsel %vm96, %v709, 0
    %v723 = vsel %vm96, %v710, 0
    %725 = vmatpush.msra.mxu0 0.0
    %726 = vmatpush.msra.mxu0 0.0
    %727 = vmatpush.msra.mxu0 0.0
    %728 = vmatpush.msra.mxu0 0.0
    %729 = vmatpush.msra.mxu0 0.0
    %730 = vmatpush.msra.mxu0 0.0
    %731 = vmatpush.msra.mxu0 0.0
    %732 = vmatpush.msra.mxu0 0.0
    %733 = vmatpush.msra.mxu0 0.0
    %734 = vmatpush.msra.mxu0 0.0
    %735 = vmatpush.msra.mxu0 0.0
    %736 = vmatpush.msra.mxu0 0.0
    %737 = vmatpush.msra.mxu0 %v714
    %738 = vmatpush.msra.mxu0 %v713
    %739 = vmatpush.msra.mxu0 %v712
    %740 = vmatpush.msra.mxu0 %v711
    %741 = vmatmul.f32.gmra.mxu0 %v720
    %v742 = vpop.f32.mrf.mxu0
    %v743 = vadd.f32 %v717, %v742
    %744 = vmatmul.f32.gmra.mxu0 %v723
    %v745 = vpop.f32.mrf.mxu0
    %v746 = vadd.f32 %v717, %v745
    %747 = vdwg.mxu0
    %748 = vmax.xlane.f32.xlu0 %v743
    %v749 = vpop.xlane.xlu0 %748
    %750 = vmax.xlane.f32.xlu0 %v746
    %v751 = vpop.xlane.xlu0 %750
    %v752 = vsub.f32 %v743, %v749
    %v753 = vsub.f32 %v746, %v751
    %v754 = vmul.f32 %v752, 1.442695
    %v755 = vpow.pop %v754
    %v756 = vmul.f32 %v753, 1.442695
    %v757 = vpow.pop %v756
    %758 = vadd.xlane.f32.xlu0 %v755
    %v759 = vpop.xlane.xlu0 %758
    %760 = vadd.xlane.f32.xlu0 %v757
    %v761 = vpop.xlane.xlu0 %760
    %v762 = vlog2.pop %v759
    %v763 = vmul.f32 %v762, 0.6931472
    %v764 = vlog2.pop %v761
    %v765 = vmul.f32 %v764, 0.6931472
    %v766 = vadd.f32 %v749, %v763
    %v767 = vadd.f32 %v751, %v765
    %v768 = vld [vmem:[%s1] sm:$0xff]
    %v769 = vld [vmem:[%s1 + $0x8] sm:$0xff]
    %770 = vset.pattern.permute.xlu0 0
    %771 = vperm.xlu0 %770, %v768
    %v772 = vpop.permute.xlu0 %771
    %773 = vset.pattern.permute.xlu0 0
    %774 = vperm.xlu0 %773, %v769
    %v775 = vpop.permute.xlu0 %774
    %vm776 = vcmp.eq.s32.totalorder %v36, %v772
    %vm777 = vcmp.eq.s32.totalorder %v36, %v775
    %v778 = vsel %vm776, %v743, 0.0
    %v779 = vsel %vm777, %v746, 0.0
    %780 = vadd.xlane.f32.xlu0 %v778
    %v781 = vpop.xlane.xlu0 %780
    %782 = vadd.xlane.f32.xlu0 %v779
    %v783 = vpop.xlane.xlu0 %782
    %v784 = vsub.f32 %v766, %v781
    %v785 = vsub.f32 %v767, %v783
    %vm786 = vcmask 7168
    %v787 = vsel %vm786, %v784, 0.0
    %v788 = vsel %vm786, %v785, 0.0
    %v789 = vadd.f32 %v787, %v788
    %790 = vadd.xlane.f32.xlu0 %v789
    %v791 = vpop.xlane.xlu0 %790
    %v792 = vrot.slane %v791, 4
    %v793 = vadd.f32 %v791, %v792
    %v794 = vrot.slane %v793, 2
    %v795 = vadd.f32 %v793, %v794
    %v796 = vrot.slane %v795, 1
    %v797 = vadd.f32 %v795, %v796
    %s798 = vtos %v797
    %s799 = smul.f32 %s798, 0.0625
    %s800 = scalar_lea.smem [#allocation3], 0
    %801 = sst [smem:[%s800]] %s799
    %vm802 = vcmask 1047559
    %v803 = vsel %vm802, %v746, -inf
    %804 = vmax.xlane.f32.xlu0 %v803
    %v805 = vpop.xlane.xlu0 %804
    %vm806 = vcmp.eq.f32.partialorder %v746, %v805
    %v807 = vsel %vm806, %v36, 128
    %v808 = vsel %vm802, %v807, 2147483647
    %v809 = vand.u32 %v808, 65535
    %v810 = vshra.s32 %v808, 16
    %v811 = vcvt.s32.f32 %v809
    %v812 = vcvt.s32.f32 %v810
    %813 = vmin.xlane.f32.xlu0 %v812
    %v814 = vpop.xlane.xlu0 %813
    %vm815 = vcmp.eq.f32.partialorder %v812, %v814
    %v816 = vsel %vm815, %v811, inf
    %817 = vmin.xlane.f32.xlu0 %v816
    %v818 = vpop.xlane.xlu0 %817
    %v819 = vcvt.f32.s32 %v818
    %v820 = vcvt.f32.s32 %v814
    %v821 = vshll.u32 %v820, 16
    %v822 = vadd.s32 %v821, %v819
    %v823 = vrot.slane %v822, 4
    %vm824 = vcmp.lt.s32.totalorder %v822, %v823
    %v825 = vsel %vm824, %v822, %v823
    %v826 = vrot.slane %v825, 2
    %vm827 = vcmp.lt.s32.totalorder %v825, %v826
    %v828 = vsel %vm827, %v825, %v826
    %v829 = vrot.slane %v828, 1
    %vm830 = vcmp.lt.s32.totalorder %v828, %v829
    %v831 = vsel %vm830, %v828, %v829
    %s832 = vtos %v831
    %s833 = scalar_lea.smem [#allocation5], 0
    %834 = sst [smem:[%s833]] %s832
    // Predicated region
    $region34: #{poem_generation_forward.1} parent=1 // pred_check
      _
    $region35: #{poem_generation_forward.1} parent=1 // pred_check_branch
      %836 = sbr.rel (0) target = $region37
    $region36: #{poem_generation_forward.1} parent=1 // pred_region
      %838 = vsyncadd [#allocation4], 0
      %s840 = sshll.u32 %s8, 4
      %s841 = int_to_ptr.hbm [resolvable:$true] %s840
      %843 = dma.smem_to_hbm [#allocation3], 16, %s841, [#allocation4]
    $region37: #{poem_generation_forward.1} parent=1 // pred_fallthru
      _
    // Predicated region
    $region38: #{poem_generation_forward.1} parent=1 // pred_check
      _
    $region39: #{poem_generation_forward.1} parent=1 // pred_check_branch
      %845 = sbr.rel (0) target = $region41
    $region40: #{poem_generation_forward.1} parent=1 // pred_region
      %847 = vsyncadd [#allocation6], 0
      %s849 = sshll.u32 %s9, 4
      %s850 = int_to_ptr.hbm [resolvable:$true] %s849
      %852 = dma.smem_to_hbm [#allocation5], 16, %s850, [#allocation6]
    $region41: #{poem_generation_forward.1} parent=1 // pred_fallthru
      _
    // Predicated region
    $region42: #{poem_generation_forward.1} parent=1 // pred_check
      _
    $region43: #{poem_generation_forward.1} parent=1 // pred_check_branch
      %854 = sbr.rel (0) target = $region45
    $region44: #{poem_generation_forward.1} parent=1 // pred_region
      %856 = dma.done [#allocation4], 16
    $region45: #{poem_generation_forward.1} parent=1 // pred_fallthru
      _
    // Predicated region
    $region46: #{poem_generation_forward.1} parent=1 // pred_check
      _
    $region47: #{poem_generation_forward.1} parent=1 // pred_check_branch
      %858 = sbr.rel (0) target = $region49
    $region48: #{poem_generation_forward.1} parent=1 // pred_region
      %860 = dma.done [#allocation6], 16
    $region49: #{poem_generation_forward.1} parent=1 // pred_fallthru
      _
    %861 = sfence
    %862 = vsyncpa [#allocation4], 1
    %863 = vsyncpa [#allocation6], 1

</llo_original>
